<compile_context>
chip_gen: v5e
topology: v5e:2x2
jax: 0.10.0
libtpu: 0.0.40
codegen_flags: <defaults>
</compile_context>

<pallas_src>
import jax
import jax.numpy as jnp
from jax.experimental import pallas as pl
from jax.experimental.pallas import tpu as pltpu


def _div_layer_kernel(p_ref, num_ref, w_ref, o_ref):
    """One batch element.

    p_ref   : (1, 2*C*K*K, Ho*Wo)  im2col patches; rows [0, CKK) = real taps,
                                   rows [CKK, 2*CKK) = imag taps.
    num_ref : (1, 2, C, Ho*Wo)     centre-cropped numerator (a = real, b = imag).
    w_ref   : (2, 2*C*K*K)         row 0 -> c = A(re)-B(im), row 1 -> d = B(re)+A(im).
    o_ref   : (1, 2, C, Ho*Wo)
    """
    patches = p_ref[0]                      # (2*CKK, HoWo)  f32
    w_cd = w_ref[...]                       # (2, 2*CKK)     f32

    # Both conv outputs from a single MXU contraction.  HIGHEST precision
    # (contract_precision<fp32>) keeps the result f32-accurate so the 1e-4
    # comparison against the f32 reference stays tight.
    cd = jnp.dot(w_cd, patches,
                 preferred_element_type=jnp.float32,
                 precision=jax.lax.Precision.HIGHEST)       # (2, HoWo)
    c = cd[0:1, :]                          # (1, HoWo)
    d = cd[1:2, :]                          # (1, HoWo)

    divisor = c * c + d * d + jnp.float32(1e-7)
    inv = pl.reciprocal(divisor, approx=True)   # EUP slot (free vs VALU)
    inv = inv * (2.0 - divisor * inv)           # one Newton step -> ~f32 exact

    a = num_ref[0, 0]                       # (C, HoWo)
    b = num_ref[0, 1]                       # (C, HoWo)

    o_ref[0, 0] = ((a * c + b * d) * inv).astype(o_ref.dtype)
    o_ref[0, 1] = ((b * c - a * d) * inv).astype(o_ref.dtype)


def div_layer_forward(x, w_a, w_b):
    """x: [B, 2, C, H, W] float32; w_a, w_b: [C, K, K] (single filter, no bias)."""
    B, CC, C, H, W = x.shape
    assert CC == 2
    K = w_a.shape[-1]
    Ho, Wo = H - K + 1, W - K + 1
    HoWo = Ho * Wo
    sx, sy = (H - Ho) // 2, (W - Wo) // 2
    CKK = C * K * K

    xf = x.astype(jnp.float32)

    # ---- layout plumbing (XLA side, outside the kernel) ---------------------
    # im2col: tap (kh, kw) of every channel, flattened so that row index is
    # (ri*C + ch)*K*K + kh*K + kw   (ri = 0 real, 1 imag), lane index = ho*Wo+wo.
    taps = [xf[:, :, :, kh:kh + Ho, kw:kw + Wo]            # (B, 2, C, Ho, Wo)
            for kh in range(K) for kw in range(K)]
    patches = jnp.stack(taps, axis=3).reshape(B, 2 * CKK, HoWo)

    # Centre-cropped numerator, spatial flattened into the lane dim.
    num = xf[:, :, :, sx:sx + Ho, sy:sy + Wo].reshape(B, 2, C, HoWo)

    # Fused conv weights:  c = [wa | -wb] . P ,  d = [wb | wa] . P
    wa_f = w_a.astype(jnp.float32).reshape(CKK)
    wb_f = w_b.astype(jnp.float32).reshape(CKK)
    w_cd = jnp.stack([jnp.concatenate([wa_f, -wb_f]),
                      jnp.concatenate([wb_f, wa_f])], axis=0)   # (2, 2*CKK)

    out_flat = pl.pallas_call(
        _div_layer_kernel,
        out_shape=jax.ShapeDtypeStruct((B, 2, C, HoWo), x.dtype),
        grid_spec=pltpu.PrefetchScalarGridSpec(
            num_scalar_prefetch=0,
            grid=(B,),
            in_specs=[
                pl.BlockSpec((1, 2 * CKK, HoWo), lambda b: (b, 0, 0)),
                pl.BlockSpec((1, 2, C, HoWo), lambda b: (b, 0, 0, 0)),
                pl.BlockSpec((2, 2 * CKK), lambda b: (0, 0)),
            ],
            out_specs=pl.BlockSpec((1, 2, C, HoWo), lambda b: (b, 0, 0, 0)),
        ),
        compiler_params=pltpu.CompilerParams(
            dimension_semantics=("parallel",),   # >=2 steps -> v7x megacore
        ),
    )(patches, num, w_cd)

    return out_flat.reshape(B, 2, C, Ho, Wo)


def _reference_forward(x, w_a, w_b):
    """Pure-JAX reference mirroring DivLayer.forward (use_one_filter=True)."""
    real = x[:, 0]
    imag = x[:, 1]

    def conv(inp, w):  # inp: (B,C,H,W), w: (C,K,K) -> (B,1,Ho,Wo)
        return jax.lax.conv_general_dilated(
            inp, w[None], window_strides=(1, 1), padding="VALID",
            dimension_numbers=("NCHW", "OIHW", "NCHW"),
            precision=jax.lax.Precision.HIGHEST)

    ar = conv(real, w_a)
    br = conv(real, w_b)
    ai = conv(imag, w_a)
    bi = conv(imag, w_b)
    c = ar - bi
    d = br + ai
    Ho, Wo = c.shape[-2], c.shape[-1]
    H, W = x.shape[-2], x.shape[-1]
    sx = (H - Ho) // 2
    sy = (W - Wo) // 2
    a = real[:, :, sx:sx + Ho, sy:sy + Wo]
    b = imag[:, :, sx:sx + Ho, sy:sy + Wo]
    divisor = c * c + d * d + 1e-7
    out_real = (a * c + b * d) / divisor
    out_imag = (b * c - a * d) / divisor
    return jnp.stack([out_real, out_imag], axis=1)


if __name__ == "__main__":
    key = jax.random.PRNGKey(0)
    kx, ka, kb = jax.random.split(key, 3)

    B, C, H, W, K = 2, 4, 16, 16, 3
    x = jax.random.normal(kx, (B, 2, C, H, W), dtype=jnp.float32)

    # Deterministic "new_init"-style weights for the two single-filter convs.
    std = (1.0 / jnp.sqrt(2.0)) / jnp.sqrt(float(K * K * 1))
    w_a = std * jax.random.normal(ka, (C, K, K), dtype=jnp.float32)
    w_b = std * jax.random.normal(kb, (C, K, K), dtype=jnp.float32)

    fwd = jax.jit(div_layer_forward)
    out = jax.block_until_ready(fwd(x, w_a, w_b))

    ref = _reference_forward(x, w_a, w_b)
    assert out.shape == (B, 2, C, H - K + 1, W - K + 1)
    assert jnp.allclose(out, ref, atol=1e-4, rtol=1e-4), "mismatch vs JAX reference"

    print("KERNEL_OK")
</pallas_src>

<mosaic_0001>
module attributes {stable_mosaic.version = 11 : i64} {
  func.func @_div_layer_kernel(%arg0: i32, %arg1: memref<1x72x196xf32, #tpu.memory_space<vmem>>, %arg2: memref<1x2x4x196xf32, #tpu.memory_space<vmem>>, %arg3: memref<2x72xf32, #tpu.memory_space<vmem>>, %arg4: memref<1x2x4x196xf32, #tpu.memory_space<vmem>>) attributes {dimension_semantics = [#tpu.dimension_semantics<parallel>], iteration_bounds = array<i64: 2>, scalar_prefetch = 0 : i64, scratch_operands = 0 : i64, tpu.core_type = #tpu.core_type<tc>, window_params = [{transform_indices = @transform_0, window_bounds = array<i64: 1, 72, 196>}, {transform_indices = @transform_1, window_bounds = array<i64: 1, 2, 4, 196>}, {pipeline_mode = #tpu.pipeline_mode<synchronous>, transform_indices = @transform_2, window_bounds = array<i64: 2, 72>}, {transform_indices = @transform_3, window_bounds = array<i64: 1, 2, 4, 196>}]} {
    %c0 = arith.constant 0 : index
    %c0_0 = arith.constant 0 : index
    %c0_1 = arith.constant 0 : index
    %0 = vector.load %arg1[%c0, %c0_0, %c0_1] : memref<1x72x196xf32, #tpu.memory_space<vmem>>, vector<1x72x196xf32>
    %1 = vector.shape_cast %0 : vector<1x72x196xf32> to vector<72x196xf32>
    %c0_2 = arith.constant 0 : index
    %c0_3 = arith.constant 0 : index
    %2 = vector.load %arg3[%c0_2, %c0_3] : memref<2x72xf32, #tpu.memory_space<vmem>>, vector<2x72xf32>
    %cst = arith.constant dense<0.000000e+00> : vector<2x196xf32>
    %3 = tpu.matmul %2, %1, %cst {dimension_numbers = #tpu.dot_dimension_numbers<[1], [0], [0], [1], [0, 0, 1, 1], [], []>, precision = #tpu.contract_precision<fp32>} : vector<2x72xf32>, vector<72x196xf32>, vector<2x196xf32> -> vector<2x196xf32>
    %4 = vector.extract_strided_slice %3 {offsets = [0, 0], sizes = [1, 196], strides = [1, 1]} : vector<2x196xf32> to vector<1x196xf32>
    %5 = vector.extract_strided_slice %3 {offsets = [1, 0], sizes = [1, 196], strides = [1, 1]} : vector<2x196xf32> to vector<1x196xf32>
    %6 = arith.mulf %4, %4 : vector<1x196xf32>
    %7 = arith.mulf %5, %5 : vector<1x196xf32>
    %8 = arith.addf %6, %7 : vector<1x196xf32>
    %cst_4 = arith.constant 1.000000e-07 : f32
    %9 = vector.broadcast %cst_4 : f32 to vector<1x196xf32>
    %10 = arith.addf %8, %9 : vector<1x196xf32>
    %11 = tpu.reciprocal %10 {approx = true} : vector<1x196xf32> -> vector<1x196xf32>
    %12 = arith.mulf %10, %11 : vector<1x196xf32>
    %cst_5 = arith.constant 2.000000e+00 : f32
    %13 = vector.broadcast %cst_5 : f32 to vector<1x196xf32>
    %14 = arith.subf %13, %12 : vector<1x196xf32>
    %15 = arith.mulf %11, %14 : vector<1x196xf32>
    %c0_6 = arith.constant 0 : index
    %c0_7 = arith.constant 0 : index
    %c0_8 = arith.constant 0 : index
    %c0_9 = arith.constant 0 : index
    %16 = vector.load %arg2[%c0_6, %c0_7, %c0_8, %c0_9] : memref<1x2x4x196xf32, #tpu.memory_space<vmem>>, vector<1x1x4x196xf32>
    %17 = vector.shape_cast %16 : vector<1x1x4x196xf32> to vector<4x196xf32>
    %c0_10 = arith.constant 0 : index
    %c1 = arith.constant 1 : index
    %c0_11 = arith.constant 0 : index
    %c0_12 = arith.constant 0 : index
    %18 = vector.load %arg2[%c0_10, %c1, %c0_11, %c0_12] : memref<1x2x4x196xf32, #tpu.memory_space<vmem>>, vector<1x1x4x196xf32>
    %19 = vector.shape_cast %18 : vector<1x1x4x196xf32> to vector<4x196xf32>
    %20 = vector.broadcast %4 : vector<1x196xf32> to vector<4x196xf32>
    %21 = arith.mulf %17, %20 : vector<4x196xf32>
    %22 = vector.broadcast %5 : vector<1x196xf32> to vector<4x196xf32>
    %23 = arith.mulf %19, %22 : vector<4x196xf32>
    %24 = arith.addf %21, %23 : vector<4x196xf32>
    %25 = vector.broadcast %15 : vector<1x196xf32> to vector<4x196xf32>
    %26 = arith.mulf %24, %25 : vector<4x196xf32>
    %c0_13 = arith.constant 0 : index
    %c0_14 = arith.constant 0 : index
    %c0_15 = arith.constant 0 : index
    %c0_16 = arith.constant 0 : index
    %27 = vector.load %arg4[%c0_13, %c0_14, %c0_15, %c0_16] : memref<1x2x4x196xf32, #tpu.memory_space<vmem>>, vector<1x1x4x196xf32>
    %28 = vector.shape_cast %27 : vector<1x1x4x196xf32> to vector<4x196xf32>
    %29 = vector.shape_cast %26 : vector<4x196xf32> to vector<1x1x4x196xf32>
    tpu.vector_store %arg4[%c0_13, %c0_14, %c0_15, %c0_16], %29 {strides = array<i32>} : memref<1x2x4x196xf32, #tpu.memory_space<vmem>>, vector<1x1x4x196xf32>,
    %30 = vector.broadcast %4 : vector<1x196xf32> to vector<4x196xf32>
    %31 = arith.mulf %19, %30 : vector<4x196xf32>
    %32 = vector.broadcast %5 : vector<1x196xf32> to vector<4x196xf32>
    %33 = arith.mulf %17, %32 : vector<4x196xf32>
    %34 = arith.subf %31, %33 : vector<4x196xf32>
    %35 = vector.broadcast %15 : vector<1x196xf32> to vector<4x196xf32>
    %36 = arith.mulf %34, %35 : vector<4x196xf32>
    %c0_17 = arith.constant 0 : index
    %c1_18 = arith.constant 1 : index
    %c0_19 = arith.constant 0 : index
    %c0_20 = arith.constant 0 : index
    %37 = vector.load %arg4[%c0_17, %c1_18, %c0_19, %c0_20] : memref<1x2x4x196xf32, #tpu.memory_space<vmem>>, vector<1x1x4x196xf32>
    %38 = vector.shape_cast %37 : vector<1x1x4x196xf32> to vector<4x196xf32>
    %39 = vector.shape_cast %36 : vector<4x196xf32> to vector<1x1x4x196xf32>
    tpu.vector_store %arg4[%c0_17, %c1_18, %c0_19, %c0_20], %39 {strides = array<i32>} : memref<1x2x4x196xf32, #tpu.memory_space<vmem>>, vector<1x1x4x196xf32>,
    return
  }
  func.func @transform_0(%arg0: i32) -> (i32, i32, i32) {
    %c0_i32 = arith.constant 0 : i32
    %c0_i32_0 = arith.constant 0 : i32
    %c0_i32_1 = arith.constant 0 : i32
    return %arg0, %c0_i32, %c0_i32_0 : i32, i32, i32
  }
  func.func @transform_1(%arg0: i32) -> (i32, i32, i32, i32) {
    %c0_i32 = arith.constant 0 : i32
    %c0_i32_0 = arith.constant 0 : i32
    %c0_i32_1 = arith.constant 0 : i32
    %c0_i32_2 = arith.constant 0 : i32
    return %arg0, %c0_i32, %c0_i32_0, %c0_i32_1 : i32, i32, i32, i32
  }
  func.func @transform_2(%arg0: i32) -> (i32, i32) {
    %c0_i32 = arith.constant 0 : i32
    %c0_i32_0 = arith.constant 0 : i32
    %c0_i32_1 = arith.constant 0 : i32
    return %c0_i32, %c0_i32_0 : i32, i32
  }
  func.func @transform_3(%arg0: i32) -> (i32, i32, i32, i32) {
    %c0_i32 = arith.constant 0 : i32
    %c0_i32_0 = arith.constant 0 : i32
    %c0_i32_1 = arith.constant 0 : i32
    %c0_i32_2 = arith.constant 0 : i32
    return %arg0, %c0_i32, %c0_i32_0, %c0_i32_1 : i32, i32, i32, i32
  }
}

</mosaic_0001>

<llo_original>
// kernel: neg.1
$region0: #{neg.1}
  #allocation0 [shape = 's32[1]{0}', space=sflag, size = 0x4, scoped, tag = 'scoped memory for neg.1']
  %s0 = inlined_call_operand.vmem [shape: f32[36], index: 0, kind: input, shape index: {}]
  %s1 = inlined_call_operand.vmem [shape: f32[36], index: 1, kind: output, shape index: {}]
  %v2 = vld [vmem:[%s0] sm:$0x1]
  %3 = xla_tuple %v2
  %4 = xla_tuple %3
  %v5 = vxor.u32 %v2, 2147483648
  %6 = xla_tuple %v5
  %7 = vst [vmem:[%s1] sm:$0x1] %v5

// kernel: div_layer_forward.1
$region0: #{div_layer_forward.1}
  #allocation0 [shape = 'u32[]', space=smem, size = 0x4, offset = 0x4, fixed_abs, tag = 'smem constant byte address 0x4 - core index']
  #allocation1 [shape = 'u32[72,128]{1,0:T(1,128)}', space=vmem, size = 0x9000, scoped, tag = 'internal scratch']
  %s0 = inlined_call_operand.vmem [shape: f32[2,72,196], index: 0, kind: input, shape index: {}]
  %s1 = inlined_call_operand.vmem [shape: f32[2,2,4,196], index: 1, kind: input, shape index: {}]
  %s2 = inlined_call_operand.vmem [shape: f32[2,72], index: 2, kind: input, shape index: {}]
  %s3 = inlined_call_operand.vmem [shape: f32[2,2,4,196], index: 3, kind: output, shape index: {}]
  %s4 = sld [smem:[#allocation0]]
  $region45: #{div_layer_forward.1} parent=0
    _
  %s6 = ssub.s32 1, %s4
  %s7 = scalar_select 0, %s6, %s4
  loop: start=0, step=1, limit=4
  $region2: #{div_layer_forward.1} parent=0 // loop_pre_header
    _
  $region3: #{div_layer_forward.1} parent=0 // loop_header
    %s9 = sphi 0, %s13
    %p10 = scmp.ge.s32.totalorder %s9, 4
    %s19 = sphi 0, %s21
    %s22 = sphi 0, %s19
    %s23 = sphi 0, %s22
    %s39 = sphi 0, %s23
    %s45 = sphi 0, %s47
    %s48 = sphi 0, %s45
    %s49 = sphi 0, %s48
    %s65 = sphi 0, %s49
    %s69 = sphi 0, %s69
    %s71 = sphi 0, %s69
    %s72 = sphi 0, %s71
    %s86 = sphi 0, %s72
    %s92 = sphi 0, %s94
    %s95 = sphi 0, %s92
    %s96 = sphi 0, %s95
    %s112 = sphi 0, %s96
  $region4: #{div_layer_forward.1} parent=0 // loop_header_branch
    %12 = sbr.rel (%p10) target = $region8
  $region5: #{div_layer_forward.1} parent=0 // loop_body
    %s14 = ssub.s32 %s9, 1
    %s15 = ssub.s32 %s9, 2
    %s16 = sadd.s32 %s9, 1
    %s17 = ssub.s32 %s9, %s16
    %p18 = scmp.eq.s32.totalorder %s17, 0
    %s20 = sadd.s32 %s19, 1
    %s21 = scalar_select %p18, %s19, %s20
    %p24 = pneg %p18
    %p25 = scmp.eq.s32.totalorder %s9, 1
    %p26 = por %p24, %p25
    %p27 = scmp.ne.s32.totalorder %s19, %s22
    %p28 = scmp.eq.s32.totalorder %s9, 0
    %p29 = por %p27, %p28
    %p30 = scmp.ne.s32.totalorder %s19, %s22
    %p31 = scmp.eq.s32.totalorder %s14, 1
    %p32 = por %p30, %p31
    %p33 = scmp.ne.s32.totalorder %s22, %s23
    %p34 = scmp.eq.s32.totalorder %s14, 0
    %p35 = por %p33, %p34
    %p36 = scmp.ne.s32.totalorder %s22, %s23
    %p37 = scmp.eq.s32.totalorder %s15, 1
    %p38 = por %p36, %p37
    %p40 = scmp.ne.s32.totalorder %s23, %s39
    %p41 = scmp.eq.s32.totalorder %s15, 0
    %p42 = por %p40, %p41
    %s43 = ssub.s32 %s9, %s16
    %p44 = scmp.eq.s32.totalorder %s43, 0
    %s46 = sadd.s32 %s45, 1
    %s47 = scalar_select %p44, %s45, %s46
    %p50 = pneg %p44
    %p51 = scmp.eq.s32.totalorder %s9, 1
    %p52 = por %p50, %p51
    %p53 = scmp.ne.s32.totalorder %s45, %s48
    %p54 = scmp.eq.s32.totalorder %s9, 0
    %p55 = por %p53, %p54
    %p56 = scmp.ne.s32.totalorder %s45, %s48
    %p57 = scmp.eq.s32.totalorder %s14, 1
    %p58 = por %p56, %p57
    %p59 = scmp.ne.s32.totalorder %s48, %s49
    %p60 = scmp.eq.s32.totalorder %s14, 0
    %p61 = por %p59, %p60
    %p62 = scmp.ne.s32.totalorder %s48, %s49
    %p63 = scmp.eq.s32.totalorder %s15, 1
    %p64 = por %p62, %p63
    %p66 = scmp.ne.s32.totalorder %s49, %s65
    %p67 = scmp.eq.s32.totalorder %s15, 0
    %p68 = por %p66, %p67
    %s70 = sadd.s32 %s69, 1
    %p73 = scmp.eq.s32.totalorder %s9, 1
    %p74 = scmp.ne.s32.totalorder %s69, %s71
    %p75 = scmp.eq.s32.totalorder %s9, 0
    %p76 = por %p74, %p75
    %p77 = scmp.ne.s32.totalorder %s69, %s71
    %p78 = scmp.eq.s32.totalorder %s14, 1
    %p79 = por %p77, %p78
    %p80 = scmp.ne.s32.totalorder %s71, %s72
    %p81 = scmp.eq.s32.totalorder %s14, 0
    %p82 = por %p80, %p81
    %p83 = scmp.ne.s32.totalorder %s71, %s72
    %p84 = scmp.eq.s32.totalorder %s15, 1
    %p85 = por %p83, %p84
    %p87 = scmp.ne.s32.totalorder %s72, %s86
    %p88 = scmp.eq.s32.totalorder %s15, 0
    %p89 = por %p87, %p88
    %s90 = ssub.s32 %s9, %s16
    %p91 = scmp.eq.s32.totalorder %s90, 0
    %s93 = sadd.s32 %s92, 1
    %s94 = scalar_select %p91, %s92, %s93
    %p97 = pneg %p91
    %p98 = scmp.eq.s32.totalorder %s9, 1
    %p99 = por %p97, %p98
    %p100 = scmp.ne.s32.totalorder %s92, %s95
    %p101 = scmp.eq.s32.totalorder %s9, 0
    %p102 = por %p100, %p101
    %p103 = scmp.ne.s32.totalorder %s92, %s95
    %p104 = scmp.eq.s32.totalorder %s14, 1
    %p105 = por %p103, %p104
    %p106 = scmp.ne.s32.totalorder %s95, %s96
    %p107 = scmp.eq.s32.totalorder %s14, 0
    %p108 = por %p106, %p107
    %p109 = scmp.ne.s32.totalorder %s95, %s96
    %p110 = scmp.eq.s32.totalorder %s15, 1
    %p111 = por %p109, %p110
    %p113 = scmp.ne.s32.totalorder %s96, %s112
    %p114 = scmp.eq.s32.totalorder %s15, 0
    %p115 = por %p113, %p114
    %p116 = scmp.le.s32.totalorder 1, %s9
    %p117 = scmp.lt.s32.totalorder %s9, 3
    %p118 = pnand %p116, %p117
    %p119 = pneg %p118
    // Predicated region
    $region9: #{div_layer_forward.1} parent=5 // pred_check
      _
    $region10: #{div_layer_forward.1} parent=5 // pred_check_branch
      %121 = sbr.rel (%p118) target = $region12
    $region11: #{div_layer_forward.1} parent=5 // pred_region
      %s122 = ssub.s32 %s9, 1
      // Predicated region
      $region13: #{div_layer_forward.1} parent=11 // pred_check
        %p123 = pneg %p82
      $region14: #{div_layer_forward.1} parent=11 // pred_check_branch
        %125 = sbr.rel (%p123) target = $region16
      $region15: #{div_layer_forward.1} parent=11 // pred_region
        _
      $region16: #{div_layer_forward.1} parent=11 // pred_fallthru
        _
    $region12: #{div_layer_forward.1} parent=5 // pred_fallthru
      _
    %p126 = scmp.lt.s32.totalorder %s9, 2
    // Predicated region
    $region17: #{div_layer_forward.1} parent=5 // pred_check
      %p127 = pneg %p126
    $region18: #{div_layer_forward.1} parent=5 // pred_check_branch
      %129 = sbr.rel (%p127) target = $region20
    $region19: #{div_layer_forward.1} parent=5 // pred_region
      // Predicated region
      $region21: #{div_layer_forward.1} parent=19 // pred_check
        %p130 = pneg %p29
      $region22: #{div_layer_forward.1} parent=19 // pred_check_branch
        %132 = sbr.rel (%p130) target = $region24
      $region23: #{div_layer_forward.1} parent=19 // pred_region
        %p133 = scmp.lt.s32.totalorder %s9, 1
        %s134 = scalar_select %p133, %s9, 1
        %s135 = smul.addr %s134, 18
        %s136 = smul.addr %s135, 8
        %s137 = scalar_lea.vmem %s0, %s136
      $region24: #{div_layer_forward.1} parent=19 // pred_fallthru
        _
      // Predicated region
      $region25: #{div_layer_forward.1} parent=19 // pred_check
        %p138 = pneg %p55
      $region26: #{div_layer_forward.1} parent=19 // pred_check_branch
        %140 = sbr.rel (%p138) target = $region28
      $region27: #{div_layer_forward.1} parent=19 // pred_region
        %p141 = scmp.lt.s32.totalorder %s9, 1
        %s142 = scalar_select %p141, %s9, 1
        %s143 = smul.addr %s142, 4
        %s144 = smul.addr %s143, 4
        %s145 = scalar_lea.vmem %s1, %s144
      $region28: #{div_layer_forward.1} parent=19 // pred_fallthru
        _
    $region20: #{div_layer_forward.1} parent=5 // pred_fallthru
      _
    %p146 = scmp.le.s32.totalorder 1, %s9
    %p147 = scmp.lt.s32.totalorder %s9, 3
    %p148 = pnand %p146, %p147
    %p149 = pneg %p148
    // Predicated region
    $region29: #{div_layer_forward.1} parent=5 // pred_check
      _
    $region30: #{div_layer_forward.1} parent=5 // pred_check_branch
      %151 = sbr.rel (%p148) target = $region32
    $region31: #{div_layer_forward.1} parent=5 // pred_region
      %s152 = ssub.s32 %s9, 1
      %p153 = scmp.lt.s32.totalorder %s14, 1
      %s154 = scalar_select %p153, %s14, 1
      %s155 = smul.addr %s154, 18
      %s156 = smul.addr %s155, 8
      %s157 = scalar_lea.vmem %s0, %s156
      %p158 = pneg %p35
      %p159 = pneg %p32
      %p160 = scmp.lt.s32.totalorder %s14, 1
      %s161 = scalar_select %p160, %s14, 1
      %s162 = smul.addr %s161, 4
      %s163 = smul.addr %s162, 4
      %s164 = scalar_lea.vmem %s1, %s163
      %p165 = pneg %p61
      %p166 = pneg %p58
      %p167 = pneg %p82
      %p168 = pneg %p79
      %p169 = pneg %p108
      %p170 = pneg %p105
      %p171 = scmp.lt.s32.totalorder %s14, 1
      %s172 = scalar_select %p171, %s14, 1
      %s173 = smul.addr %s172, 4
      %s174 = smul.addr %s173, 4
      %s175 = scalar_lea.vmem %s3, %s174
      %p176 = scmp.lt.s32.totalorder %s14, 1
      %s177 = scalar_select %p176, %s14, 1
      %s178 = smul.addr %s177, 18
      %s179 = smul.addr %s178, 8
      %s180 = scalar_lea.vmem %s0, %s179
      %p181 = scmp.lt.s32.totalorder %s14, 1
      %s182 = scalar_select %p181, %s14, 1
      %s183 = smul.addr %s182, 4
      %s184 = smul.addr %s183, 4
      %s185 = scalar_lea.vmem %s1, %s184
      %p186 = scmp.lt.s32.totalorder %s14, 1
      %s187 = scalar_select %p186, %s14, 1
      %s188 = smul.addr %s187, 4
      %s189 = smul.addr %s188, 4
      %s190 = scalar_lea.vmem %s3, %s189
      %v191 = vld [vmem:[%s180] sm:$0xff]
      %v192 = vld [vmem:[%s180 + $0x8] sm:$0xff]
      %v193 = vld [vmem:[%s180 + $0x10] sm:$0xff]
      %v194 = vld [vmem:[%s180 + $0x18] sm:$0xff]
      %v195 = vld [vmem:[%s180 + $0x20] sm:$0xff]
      %v196 = vld [vmem:[%s180 + $0x28] sm:$0xff]
      %v197 = vld [vmem:[%s180 + $0x30] sm:$0xff]
      %v198 = vld [vmem:[%s180 + $0x38] sm:$0xff]
      %v199 = vld [vmem:[%s180 + $0x40] sm:$0xff]
      %v200 = vld [vmem:[%s180 + $0x48] sm:$0xff]
      %v201 = vld [vmem:[%s180 + $0x50] sm:$0xff]
      %v202 = vld [vmem:[%s180 + $0x58] sm:$0xff]
      %v203 = vld [vmem:[%s180 + $0x60] sm:$0xff]
      %v204 = vld [vmem:[%s180 + $0x68] sm:$0xff]
      %v205 = vld [vmem:[%s180 + $0x70] sm:$0xff]
      %v206 = vld [vmem:[%s180 + $0x78] sm:$0xff]
      %v207 = vld [vmem:[%s180 + $0x80] sm:$0xff]
      %v208 = vld [vmem:[%s180 + $0x88] sm:$0xff]
      %v209 = vld [vmem:[%s2] sm:$0x3]
      %vm210 = vcmask 588800
      %v212 = vsel %vm210, %v209, 0
      %214 = vmatpush.msra.mxu0 0.0
      %215 = vmatpush.msra.mxu0 0.0
      %216 = vmatpush.msra.mxu0 0.0
      %217 = vmatpush.msra.mxu0 0.0
      %218 = vmatpush.msra.mxu0 0.0
      %219 = vmatpush.msra.mxu0 0.0
      %220 = vmatpush.msra.mxu0 0.0
      %v221 = vand.u32 %v207, 4294901760
      %222 = vmatpush.msra.mxu0 %v221
      %v223 = vand.u32 %v205, 4294901760
      %224 = vmatpush.msra.mxu0 %v223
      %v225 = vand.u32 %v203, 4294901760
      %226 = vmatpush.msra.mxu0 %v225
      %v227 = vand.u32 %v201, 4294901760
      %228 = vmatpush.msra.mxu0 %v227
      %v229 = vand.u32 %v199, 4294901760
      %230 = vmatpush.msra.mxu0 %v229
      %v231 = vand.u32 %v197, 4294901760
      %232 = vmatpush.msra.mxu0 %v231
      %v233 = vand.u32 %v195, 4294901760
      %234 = vmatpush.msra.mxu0 %v233
      %v235 = vand.u32 %v193, 4294901760
      %236 = vmatpush.msra.mxu0 %v235
      %v237 = vand.u32 %v191, 4294901760
      %238 = vmatpush.msra.mxu0 %v237
      %v239 = vand.u32 %v212, 4294901760
      %v240 = vsub.f32 %v212, %v239
      %v241 = vand.u32 %v240, 4294901760
      %v242 = vsub.f32 %v240, %v241
      %v243 = vand.u32 %v242, 4294901760
      %244 = vmatmul.f32.gmra.mxu0 %v243
      %v245 = vpop.f32.mrf.mxu0
      %v246 = vadd.f32 0.0, %v245
      %247 = vdwg.mxu0
      %248 = vmatpush.msra.mxu0 0.0
      %249 = vmatpush.msra.mxu0 0.0
      %250 = vmatpush.msra.mxu0 0.0
      %251 = vmatpush.msra.mxu0 0.0
      %252 = vmatpush.msra.mxu0 0.0
      %253 = vmatpush.msra.mxu0 0.0
      %254 = vmatpush.msra.mxu0 0.0
      %v255 = vand.u32 %v207, 4294901760
      %v256 = vsub.f32 %v207, %v255
      %v257 = vand.u32 %v256, 4294901760
      %v258 = vsub.f32 %v256, %v257
      %v259 = vand.u32 %v258, 4294901760
      %260 = vmatpush.msra.mxu0 %v259
      %v261 = vand.u32 %v205, 4294901760
      %v262 = vsub.f32 %v205, %v261
      %v263 = vand.u32 %v262, 4294901760
      %v264 = vsub.f32 %v262, %v263
      %v265 = vand.u32 %v264, 4294901760
      %266 = vmatpush.msra.mxu0 %v265
      %v267 = vand.u32 %v203, 4294901760
      %v268 = vsub.f32 %v203, %v267
      %v269 = vand.u32 %v268, 4294901760
      %v270 = vsub.f32 %v268, %v269
      %v271 = vand.u32 %v270, 4294901760
      %272 = vmatpush.msra.mxu0 %v271
      %v273 = vand.u32 %v201, 4294901760
      %v274 = vsub.f32 %v201, %v273
      %v275 = vand.u32 %v274, 4294901760
      %v276 = vsub.f32 %v274, %v275
      %v277 = vand.u32 %v276, 4294901760
      %278 = vmatpush.msra.mxu0 %v277
      %v279 = vand.u32 %v199, 4294901760
      %v280 = vsub.f32 %v199, %v279
      %v281 = vand.u32 %v280, 4294901760
      %v282 = vsub.f32 %v280, %v281
      %v283 = vand.u32 %v282, 4294901760
      %284 = vmatpush.msra.mxu0 %v283
      %v285 = vand.u32 %v197, 4294901760
      %v286 = vsub.f32 %v197, %v285
      %v287 = vand.u32 %v286, 4294901760
      %v288 = vsub.f32 %v286, %v287
      %v289 = vand.u32 %v288, 4294901760
      %290 = vmatpush.msra.mxu0 %v289
      %v291 = vand.u32 %v195, 4294901760
      %v292 = vsub.f32 %v195, %v291
      %v293 = vand.u32 %v292, 4294901760
      %v294 = vsub.f32 %v292, %v293
      %v295 = vand.u32 %v294, 4294901760
      %296 = vmatpush.msra.mxu0 %v295
      %v297 = vand.u32 %v193, 4294901760
      %v298 = vsub.f32 %v193, %v297
      %v299 = vand.u32 %v298, 4294901760
      %v300 = vsub.f32 %v298, %v299
      %v301 = vand.u32 %v300, 4294901760
      %302 = vmatpush.msra.mxu0 %v301
      %v303 = vand.u32 %v191, 4294901760
      %v304 = vsub.f32 %v191, %v303
      %v305 = vand.u32 %v304, 4294901760
      %v306 = vsub.f32 %v304, %v305
      %v307 = vand.u32 %v306, 4294901760
      %308 = vmatpush.msra.mxu0 %v307
      %v309 = vand.u32 %v212, 4294901760
      %310 = vmatmul.f32.gmra.mxu0 %v309
      %v311 = vpop.f32.mrf.mxu0
      %v312 = vadd.f32 %v246, %v311
      %313 = vdwg.mxu0
      %314 = vmatpush.msra.mxu0 0.0
      %315 = vmatpush.msra.mxu0 0.0
      %316 = vmatpush.msra.mxu0 0.0
      %317 = vmatpush.msra.mxu0 0.0
      %318 = vmatpush.msra.mxu0 0.0
      %319 = vmatpush.msra.mxu0 0.0
      %320 = vmatpush.msra.mxu0 0.0
      %v321 = vand.u32 %v207, 4294901760
      %v322 = vsub.f32 %v207, %v321
      %323 = vmatpush.msra.mxu0 %v322
      %v324 = vand.u32 %v205, 4294901760
      %v325 = vsub.f32 %v205, %v324
      %326 = vmatpush.msra.mxu0 %v325
      %v327 = vand.u32 %v203, 4294901760
      %v328 = vsub.f32 %v203, %v327
      %329 = vmatpush.msra.mxu0 %v328
      %v330 = vand.u32 %v201, 4294901760
      %v331 = vsub.f32 %v201, %v330
      %332 = vmatpush.msra.mxu0 %v331
      %v333 = vand.u32 %v199, 4294901760
      %v334 = vsub.f32 %v199, %v333
      %335 = vmatpush.msra.mxu0 %v334
      %v336 = vand.u32 %v197, 4294901760
      %v337 = vsub.f32 %v197, %v336
      %338 = vmatpush.msra.mxu0 %v337
      %v339 = vand.u32 %v195, 4294901760
      %v340 = vsub.f32 %v195, %v339
      %341 = vmatpush.msra.mxu0 %v340
      %v342 = vand.u32 %v193, 4294901760
      %v343 = vsub.f32 %v193, %v342
      %344 = vmatpush.msra.mxu0 %v343
      %v345 = vand.u32 %v191, 4294901760
      %v346 = vsub.f32 %v191, %v345
      %347 = vmatpush.msra.mxu0 %v346
      %v348 = vand.u32 %v212, 4294901760
      %v349 = vsub.f32 %v212, %v348
      %350 = vmatmul.f32.gmra.mxu0 %v349
      %v351 = vpop.f32.mrf.mxu0
      %v352 = vadd.f32 %v312, %v351
      %353 = vdwg.mxu0
      %354 = vmatpush.msra.mxu0 0.0
      %355 = vmatpush.msra.mxu0 0.0
      %356 = vmatpush.msra.mxu0 0.0
      %357 = vmatpush.msra.mxu0 0.0
      %358 = vmatpush.msra.mxu0 0.0
      %359 = vmatpush.msra.mxu0 0.0
      %360 = vmatpush.msra.mxu0 0.0
      %v361 = vand.u32 %v207, 4294901760
      %362 = vmatpush.msra.mxu0 %v361
      %v363 = vand.u32 %v205, 4294901760
      %364 = vmatpush.msra.mxu0 %v363
      %v365 = vand.u32 %v203, 4294901760
      %366 = vmatpush.msra.mxu0 %v365
      %v367 = vand.u32 %v201, 4294901760
      %368 = vmatpush.msra.mxu0 %v367
      %v369 = vand.u32 %v199, 4294901760
      %370 = vmatpush.msra.mxu0 %v369
      %v371 = vand.u32 %v197, 4294901760
      %372 = vmatpush.msra.mxu0 %v371
      %v373 = vand.u32 %v195, 4294901760
      %374 = vmatpush.msra.mxu0 %v373
      %v375 = vand.u32 %v193, 4294901760
      %376 = vmatpush.msra.mxu0 %v375
      %v377 = vand.u32 %v191, 4294901760
      %378 = vmatpush.msra.mxu0 %v377
      %v379 = vand.u32 %v212, 4294901760
      %v380 = vsub.f32 %v212, %v379
      %v381 = vand.u32 %v380, 4294901760
      %382 = vmatmul.f32.gmra.mxu0 %v381
      %v383 = vpop.f32.mrf.mxu0
      %v384 = vadd.f32 %v352, %v383
      %385 = vdwg.mxu0
      %386 = vmatpush.msra.mxu0 0.0
      %387 = vmatpush.msra.mxu0 0.0
      %388 = vmatpush.msra.mxu0 0.0
      %389 = vmatpush.msra.mxu0 0.0
      %390 = vmatpush.msra.mxu0 0.0
      %391 = vmatpush.msra.mxu0 0.0
      %392 = vmatpush.msra.mxu0 0.0
      %v393 = vand.u32 %v207, 4294901760
      %v394 = vsub.f32 %v207, %v393
      %v395 = vand.u32 %v394, 4294901760
      %396 = vmatpush.msra.mxu0 %v395
      %v397 = vand.u32 %v205, 4294901760
      %v398 = vsub.f32 %v205, %v397
      %v399 = vand.u32 %v398, 4294901760
      %400 = vmatpush.msra.mxu0 %v399
      %v401 = vand.u32 %v203, 4294901760
      %v402 = vsub.f32 %v203, %v401
      %v403 = vand.u32 %v402, 4294901760
      %404 = vmatpush.msra.mxu0 %v403
      %v405 = vand.u32 %v201, 4294901760
      %v406 = vsub.f32 %v201, %v405
      %v407 = vand.u32 %v406, 4294901760
      %408 = vmatpush.msra.mxu0 %v407
      %v409 = vand.u32 %v199, 4294901760
      %v410 = vsub.f32 %v199, %v409
      %v411 = vand.u32 %v410, 4294901760
      %412 = vmatpush.msra.mxu0 %v411
      %v413 = vand.u32 %v197, 4294901760
      %v414 = vsub.f32 %v197, %v413
      %v415 = vand.u32 %v414, 4294901760
      %416 = vmatpush.msra.mxu0 %v415
      %v417 = vand.u32 %v195, 4294901760
      %v418 = vsub.f32 %v195, %v417
      %v419 = vand.u32 %v418, 4294901760
      %420 = vmatpush.msra.mxu0 %v419
      %v421 = vand.u32 %v193, 4294901760
      %v422 = vsub.f32 %v193, %v421
      %v423 = vand.u32 %v422, 4294901760
      %424 = vmatpush.msra.mxu0 %v423
      %v425 = vand.u32 %v191, 4294901760
      %v426 = vsub.f32 %v191, %v425
      %v427 = vand.u32 %v426, 4294901760
      %428 = vmatpush.msra.mxu0 %v427
      %v429 = vand.u32 %v212, 4294901760
      %430 = vmatmul.f32.gmra.mxu0 %v429
      %v431 = vpop.f32.mrf.mxu0
      %v432 = vadd.f32 %v384, %v431
      %433 = vdwg.mxu0
      %434 = vmatpush.msra.mxu0 0.0
      %435 = vmatpush.msra.mxu0 0.0
      %436 = vmatpush.msra.mxu0 0.0
      %437 = vmatpush.msra.mxu0 0.0
      %438 = vmatpush.msra.mxu0 0.0
      %439 = vmatpush.msra.mxu0 0.0
      %440 = vmatpush.msra.mxu0 0.0
      %v441 = vand.u32 %v207, 4294901760
      %442 = vmatpush.msra.mxu0 %v441
      %v443 = vand.u32 %v205, 4294901760
      %444 = vmatpush.msra.mxu0 %v443
      %v445 = vand.u32 %v203, 4294901760
      %446 = vmatpush.msra.mxu0 %v445
      %v447 = vand.u32 %v201, 4294901760
      %448 = vmatpush.msra.mxu0 %v447
      %v449 = vand.u32 %v199, 4294901760
      %450 = vmatpush.msra.mxu0 %v449
      %v451 = vand.u32 %v197, 4294901760
      %452 = vmatpush.msra.mxu0 %v451
      %v453 = vand.u32 %v195, 4294901760
      %454 = vmatpush.msra.mxu0 %v453
      %v455 = vand.u32 %v193, 4294901760
      %456 = vmatpush.msra.mxu0 %v455
      %v457 = vand.u32 %v191, 4294901760
      %458 = vmatpush.msra.mxu0 %v457
      %v459 = vand.u32 %v212, 4294901760
      %460 = vmatmul.f32.gmra.mxu0 %v459
      %v461 = vpop.f32.mrf.mxu0
      %v462 = vadd.f32 %v432, %v461
      %463 = vdwg.mxu0
      %464 = vmatpush.msra.mxu0 0.0
      %465 = vmatpush.msra.mxu0 0.0
      %466 = vmatpush.msra.mxu0 0.0
      %467 = vmatpush.msra.mxu0 0.0
      %468 = vmatpush.msra.mxu0 0.0
      %469 = vmatpush.msra.mxu0 0.0
      %470 = vmatpush.msra.mxu0 0.0
      %v471 = vand.u32 %v208, 4294901760
      %472 = vmatpush.msra.mxu0 %v471
      %v473 = vand.u32 %v206, 4294901760
      %474 = vmatpush.msra.mxu0 %v473
      %v475 = vand.u32 %v204, 4294901760
      %476 = vmatpush.msra.mxu0 %v475
      %v477 = vand.u32 %v202, 4294901760
      %478 = vmatpush.msra.mxu0 %v477
      %v479 = vand.u32 %v200, 4294901760
      %480 = vmatpush.msra.mxu0 %v479
      %v481 = vand.u32 %v198, 4294901760
      %482 = vmatpush.msra.mxu0 %v481
      %v483 = vand.u32 %v196, 4294901760
      %484 = vmatpush.msra.mxu0 %v483
      %v485 = vand.u32 %v194, 4294901760
      %486 = vmatpush.msra.mxu0 %v485
      %v487 = vand.u32 %v192, 4294901760
      %488 = vmatpush.msra.mxu0 %v487
      %v489 = vand.u32 %v212, 4294901760
      %v490 = vsub.f32 %v212, %v489
      %v491 = vand.u32 %v490, 4294901760
      %v492 = vsub.f32 %v490, %v491
      %v493 = vand.u32 %v492, 4294901760
      %494 = vmatmul.f32.gmra.mxu0 %v493
      %v495 = vpop.f32.mrf.mxu0
      %v496 = vadd.f32 0.0, %v495
      %497 = vdwg.mxu0
      %498 = vmatpush.msra.mxu0 0.0
      %499 = vmatpush.msra.mxu0 0.0
      %500 = vmatpush.msra.mxu0 0.0
      %501 = vmatpush.msra.mxu0 0.0
      %502 = vmatpush.msra.mxu0 0.0
      %503 = vmatpush.msra.mxu0 0.0
      %504 = vmatpush.msra.mxu0 0.0
      %v505 = vand.u32 %v208, 4294901760
      %v506 = vsub.f32 %v208, %v505
      %v507 = vand.u32 %v506, 4294901760
      %v508 = vsub.f32 %v506, %v507
      %v509 = vand.u32 %v508, 4294901760
      %510 = vmatpush.msra.mxu0 %v509
      %v511 = vand.u32 %v206, 4294901760
      %v512 = vsub.f32 %v206, %v511
      %v513 = vand.u32 %v512, 4294901760
      %v514 = vsub.f32 %v512, %v513
      %v515 = vand.u32 %v514, 4294901760
      %516 = vmatpush.msra.mxu0 %v515
      %v517 = vand.u32 %v204, 4294901760
      %v518 = vsub.f32 %v204, %v517
      %v519 = vand.u32 %v518, 4294901760
      %v520 = vsub.f32 %v518, %v519
      %v521 = vand.u32 %v520, 4294901760
      %522 = vmatpush.msra.mxu0 %v521
      %v523 = vand.u32 %v202, 4294901760
      %v524 = vsub.f32 %v202, %v523
      %v525 = vand.u32 %v524, 4294901760
      %v526 = vsub.f32 %v524, %v525
      %v527 = vand.u32 %v526, 4294901760
      %528 = vmatpush.msra.mxu0 %v527
      %v529 = vand.u32 %v200, 4294901760
      %v530 = vsub.f32 %v200, %v529
      %v531 = vand.u32 %v530, 4294901760
      %v532 = vsub.f32 %v530, %v531
      %v533 = vand.u32 %v532, 4294901760
      %534 = vmatpush.msra.mxu0 %v533
      %v535 = vand.u32 %v198, 4294901760
      %v536 = vsub.f32 %v198, %v535
      %v537 = vand.u32 %v536, 4294901760
      %v538 = vsub.f32 %v536, %v537
      %v539 = vand.u32 %v538, 4294901760
      %540 = vmatpush.msra.mxu0 %v539
      %v541 = vand.u32 %v196, 4294901760
      %v542 = vsub.f32 %v196, %v541
      %v543 = vand.u32 %v542, 4294901760
      %v544 = vsub.f32 %v542, %v543
      %v545 = vand.u32 %v544, 4294901760
      %546 = vmatpush.msra.mxu0 %v545
      %v547 = vand.u32 %v194, 4294901760
      %v548 = vsub.f32 %v194, %v547
      %v549 = vand.u32 %v548, 4294901760
      %v550 = vsub.f32 %v548, %v549
      %v551 = vand.u32 %v550, 4294901760
      %552 = vmatpush.msra.mxu0 %v551
      %v553 = vand.u32 %v192, 4294901760
      %v554 = vsub.f32 %v192, %v553
      %v555 = vand.u32 %v554, 4294901760
      %v556 = vsub.f32 %v554, %v555
      %v557 = vand.u32 %v556, 4294901760
      %558 = vmatpush.msra.mxu0 %v557
      %v559 = vand.u32 %v212, 4294901760
      %560 = vmatmul.f32.gmra.mxu0 %v559
      %v561 = vpop.f32.mrf.mxu0
      %v562 = vadd.f32 %v496, %v561
      %563 = vdwg.mxu0
      %564 = vmatpush.msra.mxu0 0.0
      %565 = vmatpush.msra.mxu0 0.0
      %566 = vmatpush.msra.mxu0 0.0
      %567 = vmatpush.msra.mxu0 0.0
      %568 = vmatpush.msra.mxu0 0.0
      %569 = vmatpush.msra.mxu0 0.0
      %570 = vmatpush.msra.mxu0 0.0
      %v571 = vand.u32 %v208, 4294901760
      %v572 = vsub.f32 %v208, %v571
      %573 = vmatpush.msra.mxu0 %v572
      %v574 = vand.u32 %v206, 4294901760
      %v575 = vsub.f32 %v206, %v574
      %576 = vmatpush.msra.mxu0 %v575
      %v577 = vand.u32 %v204, 4294901760
      %v578 = vsub.f32 %v204, %v577
      %579 = vmatpush.msra.mxu0 %v578
      %v580 = vand.u32 %v202, 4294901760
      %v581 = vsub.f32 %v202, %v580
      %582 = vmatpush.msra.mxu0 %v581
      %v583 = vand.u32 %v200, 4294901760
      %v584 = vsub.f32 %v200, %v583
      %585 = vmatpush.msra.mxu0 %v584
      %v586 = vand.u32 %v198, 4294901760
      %v587 = vsub.f32 %v198, %v586
      %588 = vmatpush.msra.mxu0 %v587
      %v589 = vand.u32 %v196, 4294901760
      %v590 = vsub.f32 %v196, %v589
      %591 = vmatpush.msra.mxu0 %v590
      %v592 = vand.u32 %v194, 4294901760
      %v593 = vsub.f32 %v194, %v592
      %594 = vmatpush.msra.mxu0 %v593
      %v595 = vand.u32 %v192, 4294901760
      %v596 = vsub.f32 %v192, %v595
      %597 = vmatpush.msra.mxu0 %v596
      %v598 = vand.u32 %v212, 4294901760
      %v599 = vsub.f32 %v212, %v598
      %600 = vmatmul.f32.gmra.mxu0 %v599
      %v601 = vpop.f32.mrf.mxu0
      %v602 = vadd.f32 %v562, %v601
      %603 = vdwg.mxu0
      %604 = vmatpush.msra.mxu0 0.0
      %605 = vmatpush.msra.mxu0 0.0
      %606 = vmatpush.msra.mxu0 0.0
      %607 = vmatpush.msra.mxu0 0.0
      %608 = vmatpush.msra.mxu0 0.0
      %609 = vmatpush.msra.mxu0 0.0
      %610 = vmatpush.msra.mxu0 0.0
      %v611 = vand.u32 %v208, 4294901760
      %612 = vmatpush.msra.mxu0 %v611
      %v613 = vand.u32 %v206, 4294901760
      %614 = vmatpush.msra.mxu0 %v613
      %v615 = vand.u32 %v204, 4294901760
      %616 = vmatpush.msra.mxu0 %v615
      %v617 = vand.u32 %v202, 4294901760
      %618 = vmatpush.msra.mxu0 %v617
      %v619 = vand.u32 %v200, 4294901760
      %620 = vmatpush.msra.mxu0 %v619
      %v621 = vand.u32 %v198, 4294901760
      %622 = vmatpush.msra.mxu0 %v621
      %v623 = vand.u32 %v196, 4294901760
      %624 = vmatpush.msra.mxu0 %v623
      %v625 = vand.u32 %v194, 4294901760
      %626 = vmatpush.msra.mxu0 %v625
      %v627 = vand.u32 %v192, 4294901760
      %628 = vmatpush.msra.mxu0 %v627
      %v629 = vand.u32 %v212, 4294901760
      %v630 = vsub.f32 %v212, %v629
      %v631 = vand.u32 %v630, 4294901760
      %632 = vmatmul.f32.gmra.mxu0 %v631
      %v633 = vpop.f32.mrf.mxu0
      %v634 = vadd.f32 %v602, %v633
      %635 = vdwg.mxu0
      %636 = vmatpush.msra.mxu0 0.0
      %637 = vmatpush.msra.mxu0 0.0
      %638 = vmatpush.msra.mxu0 0.0
      %639 = vmatpush.msra.mxu0 0.0
      %640 = vmatpush.msra.mxu0 0.0
      %641 = vmatpush.msra.mxu0 0.0
      %642 = vmatpush.msra.mxu0 0.0
      %v643 = vand.u32 %v208, 4294901760
      %v644 = vsub.f32 %v208, %v643
      %v645 = vand.u32 %v644, 4294901760
      %646 = vmatpush.msra.mxu0 %v645
      %v647 = vand.u32 %v206, 4294901760
      %v648 = vsub.f32 %v206, %v647
      %v649 = vand.u32 %v648, 4294901760
      %650 = vmatpush.msra.mxu0 %v649
      %v651 = vand.u32 %v204, 4294901760
      %v652 = vsub.f32 %v204, %v651
      %v653 = vand.u32 %v652, 4294901760
      %654 = vmatpush.msra.mxu0 %v653
      %v655 = vand.u32 %v202, 4294901760
      %v656 = vsub.f32 %v202, %v655
      %v657 = vand.u32 %v656, 4294901760
      %658 = vmatpush.msra.mxu0 %v657
      %v659 = vand.u32 %v200, 4294901760
      %v660 = vsub.f32 %v200, %v659
      %v661 = vand.u32 %v660, 4294901760
      %662 = vmatpush.msra.mxu0 %v661
      %v663 = vand.u32 %v198, 4294901760
      %v664 = vsub.f32 %v198, %v663
      %v665 = vand.u32 %v664, 4294901760
      %666 = vmatpush.msra.mxu0 %v665
      %v667 = vand.u32 %v196, 4294901760
      %v668 = vsub.f32 %v196, %v667
      %v669 = vand.u32 %v668, 4294901760
      %670 = vmatpush.msra.mxu0 %v669
      %v671 = vand.u32 %v194, 4294901760
      %v672 = vsub.f32 %v194, %v671
      %v673 = vand.u32 %v672, 4294901760
      %674 = vmatpush.msra.mxu0 %v673
      %v675 = vand.u32 %v192, 4294901760
      %v676 = vsub.f32 %v192, %v675
      %v677 = vand.u32 %v676, 4294901760
      %678 = vmatpush.msra.mxu0 %v677
      %v679 = vand.u32 %v212, 4294901760
      %680 = vmatmul.f32.gmra.mxu0 %v679
      %v681 = vpop.f32.mrf.mxu0
      %v682 = vadd.f32 %v634, %v681
      %683 = vdwg.mxu0
      %684 = vmatpush.msra.mxu0 0.0
      %685 = vmatpush.msra.mxu0 0.0
      %686 = vmatpush.msra.mxu0 0.0
      %687 = vmatpush.msra.mxu0 0.0
      %688 = vmatpush.msra.mxu0 0.0
      %689 = vmatpush.msra.mxu0 0.0
      %690 = vmatpush.msra.mxu0 0.0
      %v691 = vand.u32 %v208, 4294901760
      %692 = vmatpush.msra.mxu0 %v691
      %v693 = vand.u32 %v206, 4294901760
      %694 = vmatpush.msra.mxu0 %v693
      %v695 = vand.u32 %v204, 4294901760
      %696 = vmatpush.msra.mxu0 %v695
      %v697 = vand.u32 %v202, 4294901760
      %698 = vmatpush.msra.mxu0 %v697
      %v699 = vand.u32 %v200, 4294901760
      %700 = vmatpush.msra.mxu0 %v699
      %v701 = vand.u32 %v198, 4294901760
      %702 = vmatpush.msra.mxu0 %v701
      %v703 = vand.u32 %v196, 4294901760
      %704 = vmatpush.msra.mxu0 %v703
      %v705 = vand.u32 %v194, 4294901760
      %706 = vmatpush.msra.mxu0 %v705
      %v707 = vand.u32 %v192, 4294901760
      %708 = vmatpush.msra.mxu0 %v707
      %v709 = vand.u32 %v212, 4294901760
      %710 = vmatmul.f32.gmra.mxu0 %v709
      %v711 = vpop.f32.mrf.mxu0
      %v712 = vadd.f32 %v682, %v711
      %713 = vdwg.mxu0
      %v714 = vmul.f32 %v462, %v462
      %v715 = vmul.f32 %v712, %v712
      %v718 = vrot.slane %v714, 1
      %v719 = vrot.slane %v715, 1
      %v722 = vadd.f32 %v714, %v718
      %v723 = vadd.f32 %v715, %v719
      %v724 = vadd.f32 %v722, 1e-07
      %v725 = vadd.f32 %v723, 1e-07
      %v726 = vrcp.pop %v724
      %v727 = vrcp.pop %v725
      %v728 = vmul.f32 %v724, %v726
      %v729 = vmul.f32 %v725, %v727
      %v730 = vsub.f32 2.0, %v728
      %v731 = vsub.f32 2.0, %v729
      %v732 = vmul.f32 %v726, %v730
      %v733 = vmul.f32 %v727, %v731
      %v734 = vld [vmem:[%s185] sm:$0xff]
      %s735 = scalar_lea.vmem %s185, 8
      %v736 = vld [vmem:[%s735] sm:$0xff]
      %v737 = vperm.slane %v462, 0
      %v738 = vperm.slane %v712, 0
      %v741 = vrot.slane %v738, 4
      %vm742 = vcmask 1043456
      %v743 = vsel %vm742, %v737, %v741
      %v745 = vmul.f32 %v734, %v743
      %v746 = vperm.slane %v462, 1
      %v747 = vperm.slane %v712, 1
      %v750 = vrot.slane %v747, 4
      %v751 = vsel %vm742, %v746, %v750
      %v753 = vmul.f32 %v736, %v751
      %v754 = vadd.f32 %v745, %v753
      %v755 = vperm.slane %v732, 0
      %v756 = vperm.slane %v733, 0
      %v759 = vrot.slane %v756, 4
      %v760 = vsel %vm742, %v755, %v759
      %v762 = vmul.f32 %v754, %v760
      %vm763 = vcmask 556036
      %vm764 = vmor %vm763, %vm742
      %765 = vst.msk [vmem:[%s190] sm:$0xff] %vm764, %v762
      %v766 = vmul.f32 %v736, %v743
      %v767 = vmul.f32 %v734, %v751
      %v768 = vsub.f32 %v766, %v767
      %v769 = vmul.f32 %v768, %v760
      %s770 = scalar_lea.vmem %s190, 8
      %771 = vst.msk [vmem:[%s770] sm:$0xff] %vm764, %v769
      %p772 = scmp.lt.s32.totalorder %s14, 1
      %s773 = scalar_select %p772, %s14, 1
      %s774 = smul.addr %s773, 4
      %s775 = smul.addr %s774, 4
      %s776 = scalar_lea.vmem %s3, %s775
      // Predicated region
      $region33: #{div_layer_forward.1} parent=31 // pred_check
        %p777 = pneg %p105
      $region34: #{div_layer_forward.1} parent=31 // pred_check_branch
        %779 = sbr.rel (%p777) target = $region36
      $region35: #{div_layer_forward.1} parent=31 // pred_region
        _
      $region36: #{div_layer_forward.1} parent=31 // pred_fallthru
        _
    $region32: #{div_layer_forward.1} parent=5 // pred_fallthru
      _
    %p780 = scmp.le.s32.totalorder 2, %s9
    // Predicated region
    $region37: #{div_layer_forward.1} parent=5 // pred_check
      %p781 = pneg %p780
    $region38: #{div_layer_forward.1} parent=5 // pred_check_branch
      %783 = sbr.rel (%p781) target = $region40
    $region39: #{div_layer_forward.1} parent=5 // pred_region
      %s784 = ssub.s32 %s9, 2
      // Predicated region
      $region41: #{div_layer_forward.1} parent=39 // pred_check
        %p785 = pneg %p111
      $region42: #{div_layer_forward.1} parent=39 // pred_check_branch
        %787 = sbr.rel (%p785) target = $region44
      $region43: #{div_layer_forward.1} parent=39 // pred_region
        %p788 = scmp.lt.s32.totalorder %s15, 1
        %s789 = scalar_select %p788, %s15, 1
        %s790 = smul.addr %s789, 4
        %s791 = smul.addr %s790, 4
        %s792 = scalar_lea.vmem %s3, %s791
      $region44: #{div_layer_forward.1} parent=39 // pred_fallthru
        _
    $region40: #{div_layer_forward.1} parent=5 // pred_fallthru
      _
  $region6: #{div_layer_forward.1} parent=0 // loop_footer
    %s13 = sadd.s32 1, %s9
  $region7: #{div_layer_forward.1} parent=0 // loop_footer_branch
    %8 = sbr.rel target = $region3
  $region8: #{div_layer_forward.1} parent=0 // loop_exit
    _

</llo_original>
